<compile_context>
chip_gen: v5e
topology: v5e:2x2
jax: 0.10.0
libtpu: 0.0.40
codegen_flags: <defaults>
</compile_context>

<pallas_src>
import functools

import jax
import jax.numpy as jnp
from jax.experimental import pallas as pl
from jax.experimental.pallas import tpu as pltpu


# Explicit scoped-VMEM budget: plenty for our tiles, safe on v7x (64 MiB physical) as well as
# v5e/v6e (128 MiB physical).
VMEM_LIMIT_BYTES = 48 * 1024 * 1024


# ---------------------------------------------------------------------------
# helpers
# ---------------------------------------------------------------------------

def _pick_tile(dim, candidates):
    """Largest candidate tile that evenly divides `dim`, else the full dim."""
    for c in candidates:
        if c <= dim and dim % c == 0:
            return c
    return dim


def _gelu(x):
    # TODO(synk): HF BERT uses exact (erf-based) GELU; tanh approximation used here.
    c = 0.7978845608028654  # sqrt(2/pi)
    return 0.5 * x * (1.0 + jnp.tanh(c * (x + 0.044715 * x * x * x)))


# ---------------------------------------------------------------------------
# Tiled linear (bias + optional activation epilogue)
# ---------------------------------------------------------------------------

def _linear_kernel(x_ref, w_ref, b_ref, o_ref, acc_ref, *, activation):
    @pl.when(pl.program_id(2) == 0)
    def _():
        acc_ref[...] = jnp.zeros_like(acc_ref)

    acc_ref[...] += jnp.dot(x_ref[...], w_ref[...],
                            preferred_element_type=jnp.float32)

    @pl.when(pl.program_id(2) == pl.num_programs(2) - 1)
    def _():
        y = acc_ref[...] + b_ref[...].astype(jnp.float32)
        if activation == "tanh":
            y = jnp.tanh(y)
        elif activation == "gelu":
            y = _gelu(y)
        o_ref[...] = y.astype(o_ref.dtype)


def linear(x, w, b, activation=None, out_dtype=jnp.bfloat16):
    """y = act(x @ w + b); x:[M,K] (bf16) w:[K,N] (bf16) b:[N] (f32) -> [M,N]."""
    M, K = x.shape
    N = w.shape[1]
    tm = _pick_tile(M, (1024, 512, 256, 128))
    tn = _pick_tile(N, (768, 512, 256, 128))
    tk = _pick_tile(K, (512, 256, 128))
    grid = (M // tm, N // tn, K // tk)
    return pl.pallas_call(
        functools.partial(_linear_kernel, activation=activation),
        out_shape=jax.ShapeDtypeStruct((M, N), out_dtype),
        grid=grid,
        in_specs=[pl.BlockSpec((tm, tk), lambda i, j, k: (i, k)),
                  pl.BlockSpec((tk, tn), lambda i, j, k: (k, j)),
                  pl.BlockSpec((1, tn), lambda i, j, k: (0, j))],
        out_specs=pl.BlockSpec((tm, tn), lambda i, j, k: (i, j)),
        scratch_shapes=[pltpu.VMEM((tm, tn), jnp.float32)],
        compiler_params=pltpu.CompilerParams(
            dimension_semantics=("parallel", "parallel", "arbitrary"),
            vmem_limit_bytes=VMEM_LIMIT_BYTES),
    )(x, w, b.reshape(1, N))


# ---------------------------------------------------------------------------
# Tiled linear with fused residual-add + LayerNorm epilogue (N kept whole)
# ---------------------------------------------------------------------------

def _linear_res_ln_kernel(x_ref, w_ref, b_ref, r_ref, g_ref, bb_ref,
                          o_ref, acc_ref, *, eps):
    @pl.when(pl.program_id(1) == 0)
    def _():
        acc_ref[...] = jnp.zeros_like(acc_ref)

    acc_ref[...] += jnp.dot(x_ref[...], w_ref[...],
                            preferred_element_type=jnp.float32)

    @pl.when(pl.program_id(1) == pl.num_programs(1) - 1)
    def _():
        y = (acc_ref[...] + b_ref[...].astype(jnp.float32)
             + r_ref[...].astype(jnp.float32))
        mu = jnp.mean(y, axis=-1, keepdims=True)
        yc = y - mu
        var = jnp.mean(yc * yc, axis=-1, keepdims=True)
        o_ref[...] = (yc * jax.lax.rsqrt(var + eps)
                      * g_ref[...].astype(jnp.float32)
                      + bb_ref[...].astype(jnp.float32)).astype(o_ref.dtype)


def linear_residual_layernorm(x, w, b, res, gamma, beta, eps=1e-12,
                              out_dtype=jnp.bfloat16):
    """LayerNorm(x @ w + b + res); x:[M,K] w:[K,N] res:[M,N]."""
    M, K = x.shape
    N = w.shape[1]
    tm = _pick_tile(M, (1024, 512, 256, 128))
    tk = _pick_tile(K, (512, 256, 128))
    grid = (M // tm, K // tk)
    return pl.pallas_call(
        functools.partial(_linear_res_ln_kernel, eps=eps),
        out_shape=jax.ShapeDtypeStruct((M, N), out_dtype),
        grid=grid,
        in_specs=[pl.BlockSpec((tm, tk), lambda i, k: (i, k)),
                  pl.BlockSpec((tk, N), lambda i, k: (k, 0)),
                  pl.BlockSpec((1, N), lambda i, k: (0, 0)),
                  pl.BlockSpec((tm, N), lambda i, k: (i, 0)),
                  pl.BlockSpec((1, N), lambda i, k: (0, 0)),
                  pl.BlockSpec((1, N), lambda i, k: (0, 0))],
        out_specs=pl.BlockSpec((tm, N), lambda i, k: (i, 0)),
        scratch_shapes=[pltpu.VMEM((tm, N), jnp.float32)],
        compiler_params=pltpu.CompilerParams(
            dimension_semantics=("parallel", "arbitrary"),
            vmem_limit_bytes=VMEM_LIMIT_BYTES),
    )(x, w, b.reshape(1, N), res, gamma.reshape(1, N), beta.reshape(1, N))


# ---------------------------------------------------------------------------
# Embedding sum (word + pos + type) fused with LayerNorm (no f32 sum in HBM)
# ---------------------------------------------------------------------------

def _emb_layernorm_kernel(we_ref, pt_ref, g_ref, b_ref, o_ref, *, eps):
    x = we_ref[0].astype(jnp.float32) + pt_ref[...].astype(jnp.float32)   # [S, H]
    mu = jnp.mean(x, axis=-1, keepdims=True)
    xc = x - mu
    var = jnp.mean(xc * xc, axis=-1, keepdims=True)
    o_ref[0] = (xc * jax.lax.rsqrt(var + eps)
                * g_ref[...].astype(jnp.float32)
                + b_ref[...].astype(jnp.float32)).astype(o_ref.dtype)


def embedding_layernorm(word_emb_gathered, pos_type_emb, gamma, beta,
                        eps=1e-12, out_dtype=jnp.bfloat16):
    """LayerNorm(word_emb[b,s] + (pos+type)[s]); word:[B,S,H] bf16, pos+type:[S,H] f32."""
    B, S, H = word_emb_gathered.shape
    return pl.pallas_call(
        functools.partial(_emb_layernorm_kernel, eps=eps),
        out_shape=jax.ShapeDtypeStruct((B, S, H), out_dtype),
        grid=(B,),
        in_specs=[pl.BlockSpec((1, S, H), lambda b: (b, 0, 0)),
                  pl.BlockSpec((S, H), lambda b: (0, 0)),
                  pl.BlockSpec((1, H), lambda b: (0, 0)),
                  pl.BlockSpec((1, H), lambda b: (0, 0))],
        out_specs=pl.BlockSpec((1, S, H), lambda b: (b, 0, 0)),
        compiler_params=pltpu.CompilerParams(
            dimension_semantics=("parallel",),
            vmem_limit_bytes=VMEM_LIMIT_BYTES),
    )(word_emb_gathered, pos_type_emb, gamma.reshape(1, H), beta.reshape(1, H))


# ---------------------------------------------------------------------------
# Attention: head-groups indexed directly from fused [B, S, 3H] qkv, 128-lane blocks.
# Grid = (batch, head_groups); each step handles `heads_per_block` heads (2 when dh=64),
# writes context straight into a [B, S, H] output (no XLA slices / transposes).
# ---------------------------------------------------------------------------

def _attention_kernel(m_ref, q_ref, k_ref, v_ref, o_ref, *,
                      scale, head_dim, heads_per_block):
    mask = m_ref[0].astype(jnp.float32)                      # [1, S], broadcast over queries
    for h in range(heads_per_block):                         # static unroll
        sl = slice(h * head_dim, (h + 1) * head_dim)
        q = q_ref[0, :, sl]                                  # [S, dh] bf16
        k = k_ref[0, :, sl]                                  # [S, dh] bf16
        s = jax.lax.dot_general(q, k, (((1,), (1,)), ((), ())),
                                preferred_element_type=jnp.float32) * scale   # [S, S] f32
        s = s + mask
        mx = jnp.max(s, axis=-1, keepdims=True)
        p = jnp.exp(s - mx)
        denom = jnp.sum(p, axis=-1, keepdims=True)
        p = p * pl.reciprocal(denom, approx=True)            # EUP reciprocal, off the VPU slot
        ctx = jnp.dot(p.astype(v_ref.dtype), v_ref[0, :, sl],
                      preferred_element_type=jnp.float32)    # [S, dh] f32
        o_ref[0, :, sl] = ctx.astype(o_ref.dtype)
    # TODO(synk): for S >= ~1024 tile the KV axis with an online-softmax (flash) accumulator.


def attention(qkv, mask_bias, scale, num_heads, hidden):
    """Softmax(scale * q k^T + mask) v, reading q/k/v head-groups out of qkv:[B,S,3H].

    Returns context laid out as [B, S, H] (heads concatenated along the hidden dim),
    ready for the W_o matmul without any transpose.
    """
    B, S, threeH = qkv.shape
    H = hidden
    dh = H // num_heads
    # head-group width: 128 lanes when the head layout allows it, else all heads at once.
    if dh >= 128:
        hpb = 1
    elif (128 % dh == 0) and (num_heads % (128 // dh) == 0):
        hpb = 128 // dh
    else:
        hpb = num_heads
    gd = hpb * dh                 # group width (lanes per block)
    ng = H // gd                  # number of head-groups

    return pl.pallas_call(
        functools.partial(_attention_kernel, scale=scale,
                          head_dim=dh, heads_per_block=hpb),
        out_shape=jax.ShapeDtypeStruct((B, S, H), qkv.dtype),
        grid=(B, ng),
        in_specs=[pl.BlockSpec((1, 1, S), lambda b, g: (b, 0, 0)),        # mask
                  pl.BlockSpec((1, S, gd), lambda b, g: (b, 0, g)),        # Q cols
                  pl.BlockSpec((1, S, gd), lambda b, g: (b, 0, ng + g)),   # K cols
                  pl.BlockSpec((1, S, gd), lambda b, g: (b, 0, 2 * ng + g))],  # V cols
        out_specs=pl.BlockSpec((1, S, gd), lambda b, g: (b, 0, g)),
        compiler_params=pltpu.CompilerParams(
            dimension_semantics=("parallel", "parallel"),
            vmem_limit_bytes=VMEM_LIMIT_BYTES),
    )(mask_bias, qkv, qkv, qkv)


# ---------------------------------------------------------------------------
# Parameter init (deterministic, synthetic — NOT a checkpoint load)
# ---------------------------------------------------------------------------

def init_params(key, cfg, n_classes):
    H, I, L = cfg["hidden"], cfg["intermediate"], cfg["layers"]
    keys = iter(jax.random.split(key, 8 + 8 * L))

    def w(shape, dtype=jnp.bfloat16):
        return (0.02 * jax.random.normal(next(keys), shape, jnp.float32)).astype(dtype)

    zeros = lambda s: jnp.zeros(s, jnp.float32)
    ones = lambda s: jnp.ones(s, jnp.float32)

    params = {
        "word_emb": w((cfg["vocab"], H), jnp.bfloat16),
        "pos_emb": w((cfg["max_pos"], H), jnp.float32),
        "type_emb": w((2, H), jnp.float32),
        "emb_ln_g": ones((H,)), "emb_ln_b": zeros((H,)),
        "pool_w": w((H, H)), "pool_b": zeros((H,)),
        "cls_w": w((H, n_classes)), "cls_b": zeros((n_classes,)),
        "layers": [],
    }
    for _ in range(L):
        wq, wk, wv = w((H, H)), w((H, H)), w((H, H))
        params["layers"].append({
            "w_qkv": jnp.concatenate([wq, wk, wv], axis=1),  # fused QKV [H, 3H]
            "b_qkv": zeros((3 * H,)),
            "wo": w((H, H)), "bo": zeros((H,)),
            "ln1_g": ones((H,)), "ln1_b": zeros((H,)),
            "w1": w((H, I)), "b1": zeros((I,)),
            "w2": w((I, H)), "b2": zeros((H,)),
            "ln2_g": ones((H,)), "ln2_b": zeros((H,)),
        })
    return params


# ---------------------------------------------------------------------------
# Forward pass (BertModel -> pooled_output -> dropout(identity) -> classifier)
# ---------------------------------------------------------------------------

def bert_classifier_forward(params, input_ids, attention_mask, cfg):
    B, S = input_ids.shape
    H, nH = cfg["hidden"], cfg["heads"]
    dh = H // nH

    # Embeddings: gather word embeddings (XLA gather), fuse (word + pos + type) + LayerNorm
    # inside one kernel — no f32 sum materialized in HBM.
    we = jnp.take(params["word_emb"], input_ids, axis=0)                  # [B,S,H] bf16
    pos_type = (params["pos_emb"][:S]
                + params["type_emb"][0][None, :]).astype(jnp.float32)     # [S,H] f32
    h = embedding_layernorm(we, pos_type,
                            params["emb_ln_g"], params["emb_ln_b"])       # [B,S,H] bf16
    h = h.reshape(B * S, H)

    # HF-style extended attention mask: (1 - mask) * -10000, shaped [B,1,S].
    mask_bias = ((1.0 - attention_mask.astype(jnp.float32)) * -10000.0).reshape(B, 1, S)
    scale = 1.0 / (dh ** 0.5)

    for lp in params["layers"]:
        x = h                                                             # [B*S, H] bf16
        qkv = linear(x, lp["w_qkv"], lp["b_qkv"])                         # fused QKV: [B*S, 3H]
        ctx = attention(qkv.reshape(B, S, 3 * H), mask_bias, scale, nH, H)  # [B, S, H]
        # attention output projection with fused residual + LayerNorm epilogue
        h = linear_residual_layernorm(ctx.reshape(B * S, H), lp["wo"], lp["bo"], x,
                                      lp["ln1_g"], lp["ln1_b"])
        # FFN: GELU fused into matmul-1, residual+LayerNorm fused into matmul-2
        ff = linear(h, lp["w1"], lp["b1"], activation="gelu")
        h = linear_residual_layernorm(ff, lp["w2"], lp["b2"], h,
                                      lp["ln2_g"], lp["ln2_b"])

    cls_tok = h.reshape(B, S, H)[:, 0, :]                                 # [B,H]
    pooled = linear(cls_tok, params["pool_w"], params["pool_b"], activation="tanh")
    # TODO(synk): nn.Dropout(p=0.3) is stochastic in train mode; identity in eval (inference).
    logits = linear(pooled, params["cls_w"], params["cls_b"], out_dtype=jnp.float32)
    return logits


# ---------------------------------------------------------------------------

if __name__ == "__main__":
    # Small demo config (head_dim=64 so two heads form one 128-lane attention group,
    # matching the real-BERT layout).
    cfg = dict(vocab=100, hidden=128, layers=2, heads=2, intermediate=256, max_pos=16)
    n_classes = 3
    B, S = 2, 8

    key = jax.random.PRNGKey(0)
    kp, ki = jax.random.split(key)
    params = init_params(kp, cfg, n_classes)

    input_ids = jax.random.randint(ki, (B, S), 0, cfg["vocab"], dtype=jnp.int32)
    attention_mask = jnp.ones((B, S), jnp.int32).at[1, 6:].set(0)         # pad last 2 tokens of row 1

    logits = bert_classifier_forward(params, input_ids, attention_mask, cfg)
    logits = jax.block_until_ready(logits)
    assert logits.shape == (B, n_classes)
    assert bool(jnp.all(jnp.isfinite(logits)))
    print("KERNEL_OK")
</pallas_src>

<mosaic_0001>
module attributes {stable_mosaic.version = 11 : i64} {
  func.func @_emb_layernorm_kernel(%arg0: i32, %arg1: memref<1x8x128xbf16, #tpu.memory_space<vmem>>, %arg2: memref<8x128xf32, #tpu.memory_space<vmem>>, %arg3: memref<1x128xf32, #tpu.memory_space<vmem>>, %arg4: memref<1x128xf32, #tpu.memory_space<vmem>>, %arg5: memref<1x8x128xbf16, #tpu.memory_space<vmem>>) attributes {dimension_semantics = [#tpu.dimension_semantics<parallel>], iteration_bounds = array<i64: 2>, scalar_prefetch = 0 : i64, scratch_operands = 0 : i64, tpu.core_type = #tpu.core_type<tc>, window_params = [{transform_indices = @transform_0, window_bounds = array<i64: 1, 8, 128>}, {pipeline_mode = #tpu.pipeline_mode<synchronous>, transform_indices = @transform_1, window_bounds = array<i64: 8, 128>}, {pipeline_mode = #tpu.pipeline_mode<synchronous>, transform_indices = @transform_2, window_bounds = array<i64: 1, 128>}, {pipeline_mode = #tpu.pipeline_mode<synchronous>, transform_indices = @transform_3, window_bounds = array<i64: 1, 128>}, {transform_indices = @transform_4, window_bounds = array<i64: 1, 8, 128>}]} {
    %c0 = arith.constant 0 : index
    %c0_0 = arith.constant 0 : index
    %c0_1 = arith.constant 0 : index
    %0 = vector.load %arg1[%c0, %c0_0, %c0_1] : memref<1x8x128xbf16, #tpu.memory_space<vmem>>, vector<1x8x128xbf16>
    %1 = vector.shape_cast %0 : vector<1x8x128xbf16> to vector<8x128xbf16>
    %2 = arith.extf %1 : vector<8x128xbf16> to vector<8x128xf32>
    %c0_2 = arith.constant 0 : index
    %c0_3 = arith.constant 0 : index
    %3 = vector.load %arg2[%c0_2, %c0_3] : memref<8x128xf32, #tpu.memory_space<vmem>>, vector<8x128xf32>
    %4 = arith.addf %2, %3 : vector<8x128xf32>
    %cst = arith.constant dense<0.000000e+00> : vector<8xf32>
    %5 = vector.multi_reduction <add>, %4, %cst [1] : vector<8x128xf32> to vector<8xf32>
    %6 = vector.shape_cast %5 : vector<8xf32> to vector<8x1xf32>
    %cst_4 = arith.constant 1.280000e+02 : f32
    %7 = vector.broadcast %cst_4 : f32 to vector<8x1xf32>
    %8 = arith.divf %6, %7 : vector<8x1xf32>
    %9 = vector.broadcast %8 : vector<8x1xf32> to vector<8x128xf32>
    %10 = arith.subf %4, %9 : vector<8x128xf32>
    %11 = arith.mulf %10, %10 : vector<8x128xf32>
    %cst_5 = arith.constant dense<0.000000e+00> : vector<8xf32>
    %12 = vector.multi_reduction <add>, %11, %cst_5 [1] : vector<8x128xf32> to vector<8xf32>
    %13 = vector.shape_cast %12 : vector<8xf32> to vector<8x1xf32>
    %cst_6 = arith.constant 1.280000e+02 : f32
    %14 = vector.broadcast %cst_6 : f32 to vector<8x1xf32>
    %15 = arith.divf %13, %14 : vector<8x1xf32>
    %cst_7 = arith.constant 9.99999996E-13 : f32
    %16 = vector.broadcast %cst_7 : f32 to vector<8x1xf32>
    %17 = arith.addf %15, %16 : vector<8x1xf32>
    %18 = math.rsqrt %17 : vector<8x1xf32>
    %19 = vector.broadcast %18 : vector<8x1xf32> to vector<8x128xf32>
    %20 = arith.mulf %10, %19 : vector<8x128xf32>
    %c0_8 = arith.constant 0 : index
    %c0_9 = arith.constant 0 : index
    %21 = vector.load %arg3[%c0_8, %c0_9] : memref<1x128xf32, #tpu.memory_space<vmem>>, vector<1x128xf32>
    %22 = vector.broadcast %21 : vector<1x128xf32> to vector<8x128xf32>
    %23 = arith.mulf %20, %22 : vector<8x128xf32>
    %c0_10 = arith.constant 0 : index
    %c0_11 = arith.constant 0 : index
    %24 = vector.load %arg4[%c0_10, %c0_11] : memref<1x128xf32, #tpu.memory_space<vmem>>, vector<1x128xf32>
    %25 = vector.broadcast %24 : vector<1x128xf32> to vector<8x128xf32>
    %26 = arith.addf %23, %25 : vector<8x128xf32>
    %27 = arith.truncf %26 : vector<8x128xf32> to vector<8x128xbf16>
    %c0_12 = arith.constant 0 : index
    %c0_13 = arith.constant 0 : index
    %c0_14 = arith.constant 0 : index
    %28 = vector.load %arg5[%c0_12, %c0_13, %c0_14] : memref<1x8x128xbf16, #tpu.memory_space<vmem>>, vector<1x8x128xbf16>
    %29 = vector.shape_cast %28 : vector<1x8x128xbf16> to vector<8x128xbf16>
    %30 = vector.shape_cast %27 : vector<8x128xbf16> to vector<1x8x128xbf16>
    tpu.vector_store %arg5[%c0_12, %c0_13, %c0_14], %30 {strides = array<i32>} : memref<1x8x128xbf16, #tpu.memory_space<vmem>>, vector<1x8x128xbf16>,
    return
  }
  func.func @transform_0(%arg0: i32) -> (i32, i32, i32) {
    %c0_i32 = arith.constant 0 : i32
    %c0_i32_0 = arith.constant 0 : i32
    %c0_i32_1 = arith.constant 0 : i32
    return %arg0, %c0_i32, %c0_i32_0 : i32, i32, i32
  }
  func.func @transform_1(%arg0: i32) -> (i32, i32) {
    %c0_i32 = arith.constant 0 : i32
    %c0_i32_0 = arith.constant 0 : i32
    %c0_i32_1 = arith.constant 0 : i32
    return %c0_i32, %c0_i32_0 : i32, i32
  }
  func.func @transform_2(%arg0: i32) -> (i32, i32) {
    %c0_i32 = arith.constant 0 : i32
    %c0_i32_0 = arith.constant 0 : i32
    %c0_i32_1 = arith.constant 0 : i32
    return %c0_i32, %c0_i32_0 : i32, i32
  }
  func.func @transform_3(%arg0: i32) -> (i32, i32) {
    %c0_i32 = arith.constant 0 : i32
    %c0_i32_0 = arith.constant 0 : i32
    %c0_i32_1 = arith.constant 0 : i32
    return %c0_i32, %c0_i32_0 : i32, i32
  }
  func.func @transform_4(%arg0: i32) -> (i32, i32, i32) {
    %c0_i32 = arith.constant 0 : i32
    %c0_i32_0 = arith.constant 0 : i32
    %c0_i32_1 = arith.constant 0 : i32
    return %arg0, %c0_i32, %c0_i32_0 : i32, i32, i32
  }
}

</mosaic_0001>

<llo_original>
// kernel: tpu_custom_call.1
$region0: #{tpu_custom_call.1}
  #allocation0 [shape = 'u32[]', space=smem, size = 0x4, offset = 0x4, fixed_abs, tag = 'smem constant byte address 0x4 - core index']
  #allocation1 [shape = 'u32[72,128]{1,0:T(1,128)}', space=vmem, size = 0x9000, scoped, tag = 'internal scratch']
  %s0 = inlined_call_operand.hbm [shape: bf16[2,8,128], index: 0, kind: input, shape index: {}]
  %s1 = inlined_call_operand.hbm [shape: f32[8,128], index: 1, kind: input, shape index: {}]
  %s2 = inlined_call_operand.vmem [shape: f32[1,128], index: 2, kind: input, shape index: {}]
  %s3 = inlined_call_operand.vmem [shape: f32[1,128], index: 3, kind: input, shape index: {}]
  %s4 = inlined_call_operand.hbm [shape: bf16[2,8,128], index: 4, kind: output, shape index: {}]
  %s5 = sld [smem:[#allocation0]]
  $region57: #{tpu_custom_call.1} parent=0
    _
  %s7 = ssub.s32 1, %s5
  %s8 = scalar_select 0, %s7, %s5
  $region1: #{tpu_custom_call.1} parent=0
    #allocation2 [shape = 'u8[4096]{0}', space=vmem, size = 0x1000, scoped, tag = 'input window, operand 0']
    #allocation3 [shape = 's32[2]{0}', space=sflag, size = 0x8, scoped, tag = 'scoped memory for tpu_custom_call.1']
    #allocation4 [shape = 's32[2]{0}', space=sflag, size = 0x8, scoped, tag = 'scoped memory for tpu_custom_call.1']
    #allocation5 [shape = 'u8[4096]{0}', space=vmem, size = 0x1000, scoped, tag = 'input window, operand 1, single buffered']
    #allocation6 [shape = 's32[1]{0}', space=sflag, size = 0x4, scoped, tag = 'scoped memory for tpu_custom_call.1']
    #allocation7 [shape = 'u8[4096]{0}', space=vmem, size = 0x1000, scoped, tag = 'output window, operand 0']
    %9 = vsyncpa [#allocation3], 0
    %s10 = scalar_lea.sflag [#allocation3], 1
    %11 = vsyncpa %s10, 0
    %12 = vsyncpa [#allocation6], 0
    %13 = vsyncpa [#allocation4], 0
    %s14 = scalar_lea.sflag [#allocation4], 1
    %15 = vsyncpa %s14, 0
    loop: start=0, step=1, limit=4
    $region2: #{tpu_custom_call.1} parent=1 // loop_pre_header
      _
    $region3: #{tpu_custom_call.1} parent=1 // loop_header
      %s17 = sphi 0, %s21
      %p18 = scmp.ge.s32.totalorder %s17, 4
      %s27 = sphi 0, %s29
      %s30 = sphi 0, %s27
      %s31 = sphi 0, %s30
      %s47 = sphi 0, %s31
      %s51 = sphi 0, %s51
      %s53 = sphi 0, %s51
      %s54 = sphi 0, %s53
      %s68 = sphi 0, %s54
      %s72 = sphi 0, %s72
      %s74 = sphi 0, %s72
      %s75 = sphi 0, %s74
      %s89 = sphi 0, %s75
      %s93 = sphi 0, %s93
      %s95 = sphi 0, %s93
      %s96 = sphi 0, %s95
      %s110 = sphi 0, %s96
      %s116 = sphi 0, %s118
      %s119 = sphi 0, %s116
      %s120 = sphi 0, %s119
      %s136 = sphi 0, %s120
    $region4: #{tpu_custom_call.1} parent=1 // loop_header_branch
      %20 = sbr.rel (%p18) target = $region8
    $region5: #{tpu_custom_call.1} parent=1 // loop_body
      %s22 = ssub.s32 %s17, 1
      %s23 = ssub.s32 %s17, 2
      %s24 = sadd.s32 %s17, 1
      %s25 = ssub.s32 %s17, %s24
      %p26 = scmp.eq.s32.totalorder %s25, 0
      %s28 = sadd.s32 %s27, 1
      %s29 = scalar_select %p26, %s27, %s28
      %p32 = pneg %p26
      %p33 = scmp.eq.s32.totalorder %s17, 1
      %p34 = por %p32, %p33
      %p35 = scmp.ne.s32.totalorder %s27, %s30
      %p36 = scmp.eq.s32.totalorder %s17, 0
      %p37 = por %p35, %p36
      %p38 = scmp.ne.s32.totalorder %s27, %s30
      %p39 = scmp.eq.s32.totalorder %s22, 1
      %p40 = por %p38, %p39
      %p41 = scmp.ne.s32.totalorder %s30, %s31
      %p42 = scmp.eq.s32.totalorder %s22, 0
      %p43 = por %p41, %p42
      %p44 = scmp.ne.s32.totalorder %s30, %s31
      %p45 = scmp.eq.s32.totalorder %s23, 1
      %p46 = por %p44, %p45
      %p48 = scmp.ne.s32.totalorder %s31, %s47
      %p49 = scmp.eq.s32.totalorder %s23, 0
      %p50 = por %p48, %p49
      %s52 = sadd.s32 %s51, 1
      %p55 = scmp.eq.s32.totalorder %s17, 1
      %p56 = scmp.ne.s32.totalorder %s51, %s53
      %p57 = scmp.eq.s32.totalorder %s17, 0
      %p58 = por %p56, %p57
      %p59 = scmp.ne.s32.totalorder %s51, %s53
      %p60 = scmp.eq.s32.totalorder %s22, 1
      %p61 = por %p59, %p60
      %p62 = scmp.ne.s32.totalorder %s53, %s54
      %p63 = scmp.eq.s32.totalorder %s22, 0
      %p64 = por %p62, %p63
      %p65 = scmp.ne.s32.totalorder %s53, %s54
      %p66 = scmp.eq.s32.totalorder %s23, 1
      %p67 = por %p65, %p66
      %p69 = scmp.ne.s32.totalorder %s54, %s68
      %p70 = scmp.eq.s32.totalorder %s23, 0
      %p71 = por %p69, %p70
      %s73 = sadd.s32 %s72, 1
      %p76 = scmp.eq.s32.totalorder %s17, 1
      %p77 = scmp.ne.s32.totalorder %s72, %s74
      %p78 = scmp.eq.s32.totalorder %s17, 0
      %p79 = por %p77, %p78
      %p80 = scmp.ne.s32.totalorder %s72, %s74
      %p81 = scmp.eq.s32.totalorder %s22, 1
      %p82 = por %p80, %p81
      %p83 = scmp.ne.s32.totalorder %s74, %s75
      %p84 = scmp.eq.s32.totalorder %s22, 0
      %p85 = por %p83, %p84
      %p86 = scmp.ne.s32.totalorder %s74, %s75
      %p87 = scmp.eq.s32.totalorder %s23, 1
      %p88 = por %p86, %p87
      %p90 = scmp.ne.s32.totalorder %s75, %s89
      %p91 = scmp.eq.s32.totalorder %s23, 0
      %p92 = por %p90, %p91
      %s94 = sadd.s32 %s93, 1
      %p97 = scmp.eq.s32.totalorder %s17, 1
      %p98 = scmp.ne.s32.totalorder %s93, %s95
      %p99 = scmp.eq.s32.totalorder %s17, 0
      %p100 = por %p98, %p99
      %p101 = scmp.ne.s32.totalorder %s93, %s95
      %p102 = scmp.eq.s32.totalorder %s22, 1
      %p103 = por %p101, %p102
      %p104 = scmp.ne.s32.totalorder %s95, %s96
      %p105 = scmp.eq.s32.totalorder %s22, 0
      %p106 = por %p104, %p105
      %p107 = scmp.ne.s32.totalorder %s95, %s96
      %p108 = scmp.eq.s32.totalorder %s23, 1
      %p109 = por %p107, %p108
      %p111 = scmp.ne.s32.totalorder %s96, %s110
      %p112 = scmp.eq.s32.totalorder %s23, 0
      %p113 = por %p111, %p112
      %s114 = ssub.s32 %s17, %s24
      %p115 = scmp.eq.s32.totalorder %s114, 0
      %s117 = sadd.s32 %s116, 1
      %s118 = scalar_select %p115, %s116, %s117
      %p121 = pneg %p115
      %p122 = scmp.eq.s32.totalorder %s17, 1
      %p123 = por %p121, %p122
      %p124 = scmp.ne.s32.totalorder %s116, %s119
      %p125 = scmp.eq.s32.totalorder %s17, 0
      %p126 = por %p124, %p125
      %p127 = scmp.ne.s32.totalorder %s116, %s119
      %p128 = scmp.eq.s32.totalorder %s22, 1
      %p129 = por %p127, %p128
      %p130 = scmp.ne.s32.totalorder %s119, %s120
      %p131 = scmp.eq.s32.totalorder %s22, 0
      %p132 = por %p130, %p131
      %p133 = scmp.ne.s32.totalorder %s119, %s120
      %p134 = scmp.eq.s32.totalorder %s23, 1
      %p135 = por %p133, %p134
      %p137 = scmp.ne.s32.totalorder %s120, %s136
      %p138 = scmp.eq.s32.totalorder %s23, 0
      %p139 = por %p137, %p138
      %p140 = scmp.le.s32.totalorder 1, %s17
      %p141 = scmp.lt.s32.totalorder %s17, 3
      %p142 = pnand %p140, %p141
      %p143 = pneg %p142
      // Predicated region
      $region9: #{tpu_custom_call.1} parent=5 // pred_check
        _
      $region10: #{tpu_custom_call.1} parent=5 // pred_check_branch
        %145 = sbr.rel (%p142) target = $region12
      $region11: #{tpu_custom_call.1} parent=5 // pred_region
        %s146 = ssub.s32 %s17, 1
        // Predicated region
        $region13: #{tpu_custom_call.1} parent=11 // pred_check
          %p147 = pneg %p64
        $region14: #{tpu_custom_call.1} parent=11 // pred_check_branch
          %149 = sbr.rel (%p147) target = $region16
        $region15: #{tpu_custom_call.1} parent=11 // pred_region
          %151 = vsyncadd [#allocation6], 0
          %s153 = sshll.u32 %s1, 4
          %s154 = int_to_ptr.hbm [resolvable:$true] %s153
          %s155 = sshll.u32 [#allocation5], 4
          %s156 = int_to_ptr.vmem [resolvable:$true] %s155
          %158 = dma.hbm_to_vmem [thread:$0]  %s154, 128, %s156, [#allocation6]
        $region16: #{tpu_custom_call.1} parent=11 // pred_fallthru
          _
        // Predicated region
        $region17: #{tpu_custom_call.1} parent=11 // pred_check
          %p159 = pneg %p85
        $region18: #{tpu_custom_call.1} parent=11 // pred_check_branch
          %161 = sbr.rel (%p159) target = $region20
        $region19: #{tpu_custom_call.1} parent=11 // pred_region
          _
        $region20: #{tpu_custom_call.1} parent=11 // pred_fallthru
          _
        // Predicated region
        $region21: #{tpu_custom_call.1} parent=11 // pred_check
          %p162 = pneg %p106
        $region22: #{tpu_custom_call.1} parent=11 // pred_check_branch
          %164 = sbr.rel (%p162) target = $region24
        $region23: #{tpu_custom_call.1} parent=11 // pred_region
          _
        $region24: #{tpu_custom_call.1} parent=11 // pred_fallthru
          _
      $region12: #{tpu_custom_call.1} parent=5 // pred_fallthru
        _
      %p165 = scmp.lt.s32.totalorder %s17, 2
      // Predicated region
      $region25: #{tpu_custom_call.1} parent=5 // pred_check
        %p166 = pneg %p165
      $region26: #{tpu_custom_call.1} parent=5 // pred_check_branch
        %168 = sbr.rel (%p166) target = $region28
      $region27: #{tpu_custom_call.1} parent=5 // pred_region
        // Predicated region
        $region29: #{tpu_custom_call.1} parent=27 // pred_check
          %p169 = pneg %p37
        $region30: #{tpu_custom_call.1} parent=27 // pred_check_branch
          %171 = sbr.rel (%p169) target = $region32
        $region31: #{tpu_custom_call.1} parent=27 // pred_region
          %s172 = sand.u32 %s27, 1
          %s173 = scalar_lea.sflag [#allocation3], %s172
          %s174 = sand.u32 %s27, 1
          %s175 = smul.addr %s174, 4
          %s176 = scalar_lea.vmem [#allocation2], %s175
          %178 = vsyncadd %s173, 0
          %s179 = smul.addr %s17, 4
          %s180 = scalar_lea.hbm %s0, %s179
          %s182 = sshll.u32 %s180, 4
          %s183 = int_to_ptr.hbm [resolvable:$true] %s182
          %s184 = sshll.u32 %s176, 4
          %s185 = int_to_ptr.vmem [resolvable:$true] %s184
          %187 = dma.hbm_to_vmem [thread:$0]  %s183, 64, %s185, %s173
        $region32: #{tpu_custom_call.1} parent=27 // pred_fallthru
          _
      $region28: #{tpu_custom_call.1} parent=5 // pred_fallthru
        _
      %p188 = scmp.le.s32.totalorder 1, %s17
      %p189 = scmp.lt.s32.totalorder %s17, 3
      %p190 = pnand %p188, %p189
      %p191 = pneg %p190
      // Predicated region
      $region33: #{tpu_custom_call.1} parent=5 // pred_check
        _
      $region34: #{tpu_custom_call.1} parent=5 // pred_check_branch
        %193 = sbr.rel (%p190) target = $region36
      $region35: #{tpu_custom_call.1} parent=5 // pred_region
        %s194 = ssub.s32 %s17, 1
        %s195 = sand.u32 %s30, 1
        %s196 = scalar_lea.sflag [#allocation3], %s195
        %s197 = sand.u32 %s30, 1
        %s198 = smul.addr %s197, 4
        %s199 = scalar_lea.vmem [#allocation2], %s198
        // Predicated region
        $region37: #{tpu_custom_call.1} parent=35 // pred_check
          %p200 = pneg %p43
        $region38: #{tpu_custom_call.1} parent=35 // pred_check_branch
          %202 = sbr.rel (%p200) target = $region40
        $region39: #{tpu_custom_call.1} parent=35 // pred_region
          %204 = dma.done %s196, 64
        $region40: #{tpu_custom_call.1} parent=35 // pred_fallthru
          _
        // Predicated region
        $region41: #{tpu_custom_call.1} parent=35 // pred_check
          %p205 = pneg %p64
        $region42: #{tpu_custom_call.1} parent=35 // pred_check_branch
          %207 = sbr.rel (%p205) target = $region44
        $region43: #{tpu_custom_call.1} parent=35 // pred_region
          %209 = dma.done [#allocation6], 128
        $region44: #{tpu_custom_call.1} parent=35 // pred_fallthru
          _
        %s210 = sand.u32 %s30, 1
        %s211 = scalar_lea.sflag [#allocation3], %s210
        %s212 = sand.u32 %s30, 1
        %s213 = smul.addr %s212, 4
        %s214 = scalar_lea.vmem [#allocation2], %s213
        %p215 = pneg %p43
        %p216 = pneg %p40
        %p217 = pneg %p64
        %p218 = pneg %p61
        %p219 = pneg %p85
        %p220 = pneg %p82
        %p221 = pneg %p106
        %p222 = pneg %p103
        %p223 = pneg %p132
        %p224 = pneg %p129
        %s225 = sand.u32 %s119, 1
        %s226 = scalar_lea.sflag [#allocation4], %s225
        %s227 = sand.u32 %s119, 1
        %s228 = smul.addr %s227, 4
        %s229 = scalar_lea.vmem [#allocation7], %s228
        %v230 = vld [vmem:[%s199] sm:$0xf]
        %v231 = vunpack.c.l.bf16 %v230
        %v232 = vld [vmem:[#allocation5] sm:$0xff]
        %v233 = vadd.f32 %v231, %v232
        %234 = vadd.xlane.f32.xlu0 %v233
        %v235 = vpop.xlane.xlu0 %234
        %v236 = vrcp.pop 128.0
        %v237 = vmul.f32 128.0, %v236
        %v238 = vsub.f32 1.0, %v237
        %v239 = vmul.f32 %v236, %v238
        %v240 = vadd.f32 %v236, %v239
        %vm241 = vweird.f32 %v236
        %v242 = vsel %vm241, %v236, %v240
        %v243 = vmul.f32 %v235, %v242
        %v244 = vsub.f32 %v233, %v243
        %v245 = vmul.f32 %v244, %v244
        %246 = vadd.xlane.f32.xlu0 %v245
        %v247 = vpop.xlane.xlu0 %246
        %v248 = vmul.f32 %v247, %v242
        %v249 = vadd.f32 %v248, 1e-12
        %v250 = vrsqrt.pop %v249
        %v251 = vmul.f32 %v250, %v249
        %v252 = vmul.f32 %v251, %v250
        %v253 = vmul.f32 0.5, %v252
        %v254 = vsub.f32 1.5, %v253
        %v255 = vmul.f32 %v250, %v254
        %vm256 = vweird.f32 %v249
        %vm257 = vweird.f32 %v250
        %vm258 = vmor %vm256, %vm257
        %v259 = vsel %vm258, %v250, %v255
        %v260 = vmul.f32 %v244, %v259
        %v261 = vld [vmem:[%s2] sm:$0x1]
        %v263 = vperm.slane %v261, 0
        %v265 = vmul.f32 %v260, %v263
        %v266 = vld [vmem:[%s3] sm:$0x1]
        %v268 = vperm.slane %v266, 0
        %v270 = vadd.f32 %v265, %v268
        %v271 = vpack.c.bf16 %v270, %v270
        %272 = vst [vmem:[%s229] sm:$0xf] %v271
        %s273 = sand.u32 %s119, 1
        %s274 = scalar_lea.sflag [#allocation4], %s273
        %s275 = sand.u32 %s119, 1
        %s276 = smul.addr %s275, 4
        %s277 = scalar_lea.vmem [#allocation7], %s276
        // Predicated region
        $region45: #{tpu_custom_call.1} parent=35 // pred_check
          %p278 = pneg %p129
        $region46: #{tpu_custom_call.1} parent=35 // pred_check_branch
          %280 = sbr.rel (%p278) target = $region48
        $region47: #{tpu_custom_call.1} parent=35 // pred_region
          %282 = vsyncadd %s274, 0
          %s283 = smul.addr %s22, 4
          %s284 = scalar_lea.hbm %s4, %s283
          %s286 = sshll.u32 %s277, 4
          %s287 = int_to_ptr.vmem [resolvable:$true] %s286
          %s288 = sshll.u32 %s284, 4
          %s289 = int_to_ptr.hbm [resolvable:$true] %s288
          %291 = dma.vmem_to_hbm [thread:$0]  %s287, 64, %s289, %s274
        $region48: #{tpu_custom_call.1} parent=35 // pred_fallthru
          _
      $region36: #{tpu_custom_call.1} parent=5 // pred_fallthru
        _
      %p292 = scmp.le.s32.totalorder 2, %s17
      // Predicated region
      $region49: #{tpu_custom_call.1} parent=5 // pred_check
        %p293 = pneg %p292
      $region50: #{tpu_custom_call.1} parent=5 // pred_check_branch
        %295 = sbr.rel (%p293) target = $region52
      $region51: #{tpu_custom_call.1} parent=5 // pred_region
        %s296 = ssub.s32 %s17, 2
        // Predicated region
        $region53: #{tpu_custom_call.1} parent=51 // pred_check
          %p297 = pneg %p135
        $region54: #{tpu_custom_call.1} parent=51 // pred_check_branch
          %299 = sbr.rel (%p297) target = $region56
        $region55: #{tpu_custom_call.1} parent=51 // pred_region
          %s300 = sand.u32 %s120, 1
          %s301 = scalar_lea.sflag [#allocation4], %s300
          %s302 = sand.u32 %s120, 1
          %s303 = smul.addr %s302, 4
          %s304 = scalar_lea.vmem [#allocation7], %s303
          %306 = dma.done %s301, 64
        $region56: #{tpu_custom_call.1} parent=51 // pred_fallthru
          _
      $region52: #{tpu_custom_call.1} parent=5 // pred_fallthru
        _
    $region6: #{tpu_custom_call.1} parent=1 // loop_footer
      %s21 = sadd.s32 1, %s17
    $region7: #{tpu_custom_call.1} parent=1 // loop_footer_branch
      %16 = sbr.rel target = $region3
    $region8: #{tpu_custom_call.1} parent=1 // loop_exit
      _
    %307 = vsyncpa [#allocation3], 1
    %s308 = scalar_lea.sflag [#allocation3], 1
    %309 = vsyncpa %s308, 1
    %310 = vsyncpa [#allocation6], 1
    %311 = vsyncpa [#allocation4], 1
    %s312 = scalar_lea.sflag [#allocation4], 1
    %313 = vsyncpa %s312, 1

</llo_original>
